<compile_context>
chip_gen: v7x
topology: tpu7x:2x2x1
jax: 0.10.0
libtpu: 0.0.40
codegen_flags: <defaults>
</compile_context>

<pallas_src>
import functools

import jax
import jax.numpy as jnp
from jax.experimental import pallas as pl
from jax.experimental.pallas import tpu as pltpu

_LANES = 128      # vreg lane width (last dim)
_SUBLANES = 8     # vreg sublane count (second-to-last dim)


def _masked_bn_kernel(x_ref, m_ref, w_ref, b_ref, o_ref, *, eps):
    # Widen only in-register/VMEM: HBM traffic stays at the narrow input
    # dtypes while all accumulation happens in f32.
    x = x_ref[...].astype(jnp.float32)                              # (B, TF)
    m = m_ref[...].astype(jnp.float32)                              # (B, TF) 0/1

    # Masked per-feature statistics (sublane/XLU reduction over batch axis).
    # Two-pass (diff-based) variance matches the PyTorch reference numerics.
    inv_denom = 1.0 / (jnp.sum(m, axis=0, keepdims=True) + 1e-10)   # (1, TF)
    mean = jnp.sum(x * m, axis=0, keepdims=True) * inv_denom        # (1, TF)
    diff = x - mean                                                 # (B, TF)
    var = jnp.sum(diff * diff * m, axis=0, keepdims=True) * inv_denom

    # Fold the affine weight into the inv-std so the elementwise normalize
    # pass (the only O(B*F) work besides the reductions) is mul + add + mul,
    # reusing the already-live `diff` instead of touching x again.
    scale = w_ref[...] * jax.lax.rsqrt(var + eps)                   # (1, TF)
    o_ref[...] = ((diff * scale + b_ref[...]) * m).astype(o_ref.dtype)


def _round_up(v, mult):
    return (v + mult - 1) // mult * mult


def masked_batch_norm_1d(x, attn_mask, weight, bias, eps=1e-5):
    """Masked BatchNorm1d forward (training path: current-batch statistics).

    x:         (B, F) float array (bf16/f32 — passed through un-cast)
    attn_mask: (B, F) 0/1 mask (bool/int/float — kept narrow on the HBM side)
    weight:    (F,) float
    bias:      (F,) float
    Returns (B, F) in x.dtype.
    """
    B, F = x.shape
    out_dtype = x.dtype

    # Keep the mask at 1 byte on the HBM side (halves/quarters its traffic).
    if attn_mask.dtype == jnp.bool_:
        attn_mask = attn_mask.astype(jnp.int8)

    # ---- feature-tile selection: lane-dense, VMEM-safe on v5e/v6e/v7x -----
    b_pad = _round_up(B, _SUBLANES)
    f_pad128 = _round_up(F, _LANES)
    itm_x = jnp.dtype(x.dtype).itemsize
    itm_m = jnp.dtype(attn_mask.dtype).itemsize
    itm_o = jnp.dtype(out_dtype).itemsize
    # Per feature column: double-buffered x/mask/out block buffers plus an
    # allowance for the in-kernel f32 working set (x_f32, m_f32, diff).
    bytes_per_col = b_pad * (2 * (itm_x + itm_m + itm_o) + 3 * 4)
    budget = 10 * 1024 * 1024                     # well under the 32 MiB cap
    cap = max(_LANES, (budget // max(bytes_per_col, 1)) // _LANES * _LANES)
    tf = int(min(f_pad128, 2048, cap))            # >512-lane tiles saturate BW
    f_pad = _round_up(F, tf)
    # TODO(synk): for extremely large batch sizes the whole-batch column no
    # longer fits VMEM; would need a batch-tiled two-phase (stats, normalize)
    # grid with cross-block moment accumulation.

    # ---- pad to full tiles; padded rows/cols carry mask == 0 --------------
    if b_pad != B or f_pad != F:
        x = jnp.pad(x, ((0, b_pad - B), (0, f_pad - F)))
        attn_mask = jnp.pad(attn_mask, ((0, b_pad - B), (0, f_pad - F)))
    w2 = weight.astype(jnp.float32).reshape(1, F)
    b2 = bias.astype(jnp.float32).reshape(1, F)
    if f_pad != F:
        w2 = jnp.pad(w2, ((0, 0), (0, f_pad - F)), constant_values=1.0)
        b2 = jnp.pad(b2, ((0, 0), (0, f_pad - F)))

    kernel = functools.partial(_masked_bn_kernel, eps=eps)
    out = pl.pallas_call(
        kernel,
        out_shape=jax.ShapeDtypeStruct((b_pad, f_pad), out_dtype),
        grid=(f_pad // tf,),
        in_specs=[
            pl.BlockSpec((b_pad, tf), lambda j: (0, j)),
            pl.BlockSpec((b_pad, tf), lambda j: (0, j)),
            pl.BlockSpec((1, tf), lambda j: (0, j)),
            pl.BlockSpec((1, tf), lambda j: (0, j)),
        ],
        out_specs=pl.BlockSpec((b_pad, tf), lambda j: (0, j)),
        compiler_params=pltpu.CompilerParams(
            dimension_semantics=("parallel",),   # shards tiles across 2 TCs on v7x
            vmem_limit_bytes=32 * 1024 * 1024,
        ),
    )(x, attn_mask, w2, b2)

    if b_pad != B or f_pad != F:
        out = out[:B, :F]
    return out


def masked_batch_norm_1d_ref(x, attn_mask, weight, bias, eps=1e-5):
    """Plain-JAX reference mirroring the PyTorch module (training path)."""
    x = x.astype(jnp.float32)
    m = attn_mask.astype(jnp.float32)
    denom = m.sum(axis=0) + 1e-10
    mean = (x * m).sum(axis=0) / denom
    var = (jnp.square(x - mean) * m).sum(axis=0) / denom
    normed = (x - mean[None, :]) / jnp.sqrt(var[None, :] + eps)
    normed = normed * weight + bias
    return normed * m


# TODO(synk): running_mean/running_var EMA updates and the is_first_batch flag
# (track_running_stats) are host-side buffer mutation outside the forward hot
# path; omitted here (training-mode normalization uses current-batch stats).

if __name__ == "__main__":
    key = jax.random.PRNGKey(0)

    # Case 1: shapes from the module's natural small config.
    num_features, batch_size = 32, 8
    kx, km, kw, kb, key = jax.random.split(key, 5)
    x = jax.random.normal(kx, (batch_size, num_features), dtype=jnp.float32)
    attn_mask = jax.random.uniform(km, (batch_size, num_features)) > 0.3  # bool
    weight = 1.0 + 0.1 * jax.random.normal(kw, (num_features,), dtype=jnp.float32)
    bias = 0.1 * jax.random.normal(kb, (num_features,), dtype=jnp.float32)

    out = jax.block_until_ready(masked_batch_norm_1d(x, attn_mask, weight, bias))
    ref = masked_batch_norm_1d_ref(x, attn_mask, weight, bias)
    assert out.shape == (batch_size, num_features)
    assert jnp.allclose(out, ref, atol=1e-5, rtol=1e-5), "mismatch vs reference (case 1)"

    # Case 2: non-aligned shapes to exercise sublane/lane padding paths.
    num_features2, batch_size2 = 200, 5
    kx2, km2, kw2, kb2, key = jax.random.split(key, 5)
    x2 = jax.random.normal(kx2, (batch_size2, num_features2), dtype=jnp.float32)
    attn_mask2 = jax.random.uniform(km2, (batch_size2, num_features2)) > 0.5
    weight2 = 1.0 + 0.1 * jax.random.normal(kw2, (num_features2,), dtype=jnp.float32)
    bias2 = 0.1 * jax.random.normal(kb2, (num_features2,), dtype=jnp.float32)

    out2 = jax.block_until_ready(masked_batch_norm_1d(x2, attn_mask2, weight2, bias2))
    ref2 = masked_batch_norm_1d_ref(x2, attn_mask2, weight2, bias2)
    assert out2.shape == (batch_size2, num_features2)
    assert jnp.allclose(out2, ref2, atol=1e-5, rtol=1e-5), "mismatch vs reference (case 2)"

    print("KERNEL_OK")
</pallas_src>

<mosaic_0001>
module attributes {stable_mosaic.version = 11 : i64} {
  func.func @_masked_bn_kernel(%arg0: i32, %arg1: memref<8x128xf32, #tpu.memory_space<vmem>>, %arg2: memref<8x128xi8, #tpu.memory_space<vmem>>, %arg3: memref<1x128xf32, #tpu.memory_space<vmem>>, %arg4: memref<1x128xf32, #tpu.memory_space<vmem>>, %arg5: memref<8x128xf32, #tpu.memory_space<vmem>>) attributes {dimension_semantics = [#tpu.dimension_semantics<parallel>], iteration_bounds = array<i64: 1>, scalar_prefetch = 0 : i64, scratch_operands = 0 : i64, tpu.core_type = #tpu.core_type<tc>, window_params = [{transform_indices = @transform_0, window_bounds = array<i64: 8, 128>}, {transform_indices = @transform_1, window_bounds = array<i64: 8, 128>}, {transform_indices = @transform_2, window_bounds = array<i64: 1, 128>}, {transform_indices = @transform_3, window_bounds = array<i64: 1, 128>}, {transform_indices = @transform_4, window_bounds = array<i64: 8, 128>}]} {
    %c0 = arith.constant 0 : index
    %c0_0 = arith.constant 0 : index
    %0 = vector.load %arg1[%c0, %c0_0] : memref<8x128xf32, #tpu.memory_space<vmem>>, vector<8x128xf32>
    %c0_1 = arith.constant 0 : index
    %c0_2 = arith.constant 0 : index
    %1 = vector.load %arg2[%c0_1, %c0_2] : memref<8x128xi8, #tpu.memory_space<vmem>>, vector<8x128xi8>
    %2 = arith.sitofp %1 : vector<8x128xi8> to vector<8x128xf32>
    %cst = arith.constant dense<0.000000e+00> : vector<128xf32>
    %3 = vector.multi_reduction <add>, %2, %cst [0] : vector<8x128xf32> to vector<128xf32>
    %4 = vector.shape_cast %3 : vector<128xf32> to vector<1x128xf32>
    %cst_3 = arith.constant 1.000000e-10 : f32
    %5 = vector.broadcast %cst_3 : f32 to vector<1x128xf32>
    %6 = arith.addf %4, %5 : vector<1x128xf32>
    %cst_4 = arith.constant 1.000000e+00 : f32
    %7 = vector.broadcast %cst_4 : f32 to vector<1x128xf32>
    %8 = arith.divf %7, %6 : vector<1x128xf32>
    %9 = arith.mulf %0, %2 : vector<8x128xf32>
    %cst_5 = arith.constant dense<0.000000e+00> : vector<128xf32>
    %10 = vector.multi_reduction <add>, %9, %cst_5 [0] : vector<8x128xf32> to vector<128xf32>
    %11 = vector.shape_cast %10 : vector<128xf32> to vector<1x128xf32>
    %12 = arith.mulf %11, %8 : vector<1x128xf32>
    %13 = vector.broadcast %12 : vector<1x128xf32> to vector<8x128xf32>
    %14 = arith.subf %0, %13 : vector<8x128xf32>
    %15 = arith.mulf %14, %14 : vector<8x128xf32>
    %16 = arith.mulf %15, %2 : vector<8x128xf32>
    %cst_6 = arith.constant dense<0.000000e+00> : vector<128xf32>
    %17 = vector.multi_reduction <add>, %16, %cst_6 [0] : vector<8x128xf32> to vector<128xf32>
    %18 = vector.shape_cast %17 : vector<128xf32> to vector<1x128xf32>
    %19 = arith.mulf %18, %8 : vector<1x128xf32>
    %c0_7 = arith.constant 0 : index
    %c0_8 = arith.constant 0 : index
    %20 = vector.load %arg3[%c0_7, %c0_8] : memref<1x128xf32, #tpu.memory_space<vmem>>, vector<1x128xf32>
    %cst_9 = arith.constant 9.99999974E-6 : f32
    %21 = vector.broadcast %cst_9 : f32 to vector<1x128xf32>
    %22 = arith.addf %19, %21 : vector<1x128xf32>
    %23 = math.rsqrt %22 : vector<1x128xf32>
    %24 = arith.mulf %20, %23 : vector<1x128xf32>
    %25 = vector.broadcast %24 : vector<1x128xf32> to vector<8x128xf32>
    %26 = arith.mulf %14, %25 : vector<8x128xf32>
    %c0_10 = arith.constant 0 : index
    %c0_11 = arith.constant 0 : index
    %27 = vector.load %arg4[%c0_10, %c0_11] : memref<1x128xf32, #tpu.memory_space<vmem>>, vector<1x128xf32>
    %28 = vector.broadcast %27 : vector<1x128xf32> to vector<8x128xf32>
    %29 = arith.addf %26, %28 : vector<8x128xf32>
    %30 = arith.mulf %29, %2 : vector<8x128xf32>
    %c0_12 = arith.constant 0 : index
    %c0_13 = arith.constant 0 : index
    %31 = vector.load %arg5[%c0_12, %c0_13] : memref<8x128xf32, #tpu.memory_space<vmem>>, vector<8x128xf32>
    tpu.vector_store %arg5[%c0_12, %c0_13], %30 {strides = array<i32>} : memref<8x128xf32, #tpu.memory_space<vmem>>, vector<8x128xf32>,
    return
  }
  func.func @transform_0(%arg0: i32) -> (i32, i32) {
    %c0_i32 = arith.constant 0 : i32
    %c0_i32_0 = arith.constant 0 : i32
    return %c0_i32, %arg0 : i32, i32
  }
  func.func @transform_1(%arg0: i32) -> (i32, i32) {
    %c0_i32 = arith.constant 0 : i32
    %c0_i32_0 = arith.constant 0 : i32
    return %c0_i32, %arg0 : i32, i32
  }
  func.func @transform_2(%arg0: i32) -> (i32, i32) {
    %c0_i32 = arith.constant 0 : i32
    %c0_i32_0 = arith.constant 0 : i32
    return %c0_i32, %arg0 : i32, i32
  }
  func.func @transform_3(%arg0: i32) -> (i32, i32) {
    %c0_i32 = arith.constant 0 : i32
    %c0_i32_0 = arith.constant 0 : i32
    return %c0_i32, %arg0 : i32, i32
  }
  func.func @transform_4(%arg0: i32) -> (i32, i32) {
    %c0_i32 = arith.constant 0 : i32
    %c0_i32_0 = arith.constant 0 : i32
    return %c0_i32, %arg0 : i32, i32
  }
}

</mosaic_0001>

<llo_original>
// kernel: tpu_custom_call.1
$region0: #{tpu_custom_call.1}
  #allocation0 [shape = 'u32[]', space=smem, size = 0x4, offset = 0x4, fixed_abs, tag = 'smem constant byte address 0x4 - core index']
  #allocation1 [shape = 'u32[144,128]{1,0:T(1,128)}', space=vmem, size = 0x12000, scoped, tag = 'internal scratch']
  %s0 = inlined_call_operand.hbm [shape: f32[8,128], index: 0, kind: input, shape index: {}]
  %s1 = inlined_call_operand.vmem [shape: s8[8,128], index: 1, kind: input, shape index: {}]
  %s2 = inlined_call_operand.vmem [shape: f32[1,128], index: 2, kind: input, shape index: {}]
  %s3 = inlined_call_operand.vmem [shape: f32[1,128], index: 3, kind: input, shape index: {}]
  %s4 = inlined_call_operand.hbm [shape: f32[8,128], index: 4, kind: output, shape index: {}]
  %s5 = sld [smem:[#allocation0]]
  $region30: #{tpu_custom_call.1} parent=0
    _
  %s7 = ssub.s32 1, %s5
  %s8 = scalar_select 0, %s7, %s5
  $region1: #{tpu_custom_call.1} parent=0
    #allocation2 [shape = 'u8[4096]{0}', space=vmem, size = 0x1000, scoped, tag = 'input window, operand 0, single buffered']
    #allocation3 [shape = 's32[1]{0}', space=sflag, size = 0x4, scoped, tag = 'scoped memory for tpu_custom_call.1']
    #allocation4 [shape = 's32[1]{0}', space=sflag, size = 0x4, scoped, tag = 'scoped memory for tpu_custom_call.1']
    #allocation5 [shape = 'u8[4096]{0}', space=vmem, size = 0x1000, scoped, tag = 'output window, operand 0, single buffered']
    %9 = vsyncpa [#allocation3], 0
    %10 = vsyncpa [#allocation4], 0
    // Predicated region
    $region2: #{tpu_custom_call.1} parent=1 // pred_check
      _
    $region3: #{tpu_custom_call.1} parent=1 // pred_check_branch
      %12 = sbr.rel (0) target = $region5
    $region4: #{tpu_custom_call.1} parent=1 // pred_region
      %s14 = ssub.s32 128, 128
      %15 = vsyncadd [#allocation3], %s14
      %s17 = sshll.u32 [#allocation2], 4
      %s18 = int_to_ptr.vmem [resolvable:$true] %s17
      %20 = dma.hbm_to_vmem [thread:$0]  %s0, 128, %s18, [#allocation3]
    $region5: #{tpu_custom_call.1} parent=1 // pred_fallthru
      _
    // Predicated region
    $region6: #{tpu_custom_call.1} parent=1 // pred_check
      _
    $region7: #{tpu_custom_call.1} parent=1 // pred_check_branch
      %22 = sbr.rel (0) target = $region9
    $region8: #{tpu_custom_call.1} parent=1 // pred_region
      _
    $region9: #{tpu_custom_call.1} parent=1 // pred_fallthru
      _
    // Predicated region
    $region10: #{tpu_custom_call.1} parent=1 // pred_check
      _
    $region11: #{tpu_custom_call.1} parent=1 // pred_check_branch
      %24 = sbr.rel (0) target = $region13
    $region12: #{tpu_custom_call.1} parent=1 // pred_region
      _
    $region13: #{tpu_custom_call.1} parent=1 // pred_fallthru
      _
    // Predicated region
    $region14: #{tpu_custom_call.1} parent=1 // pred_check
      _
    $region15: #{tpu_custom_call.1} parent=1 // pred_check_branch
      %26 = sbr.rel (0) target = $region17
    $region16: #{tpu_custom_call.1} parent=1 // pred_region
      _
    $region17: #{tpu_custom_call.1} parent=1 // pred_fallthru
      _
    // Predicated region
    $region18: #{tpu_custom_call.1} parent=1 // pred_check
      _
    $region19: #{tpu_custom_call.1} parent=1 // pred_check_branch
      %28 = sbr.rel (0) target = $region21
    $region20: #{tpu_custom_call.1} parent=1 // pred_region
      %29 = dma.done [#allocation3], 128
    $region21: #{tpu_custom_call.1} parent=1 // pred_fallthru
      _
    %v30 = vld [vmem:[#allocation2] sm:$0xff]
    %v31 = vld [vmem:[%s1] sm:$0x3]
    %v32 = vunpack.c.0.s8 %v31
    %v33 = vcvt.s32.f32 %v32
    %v34 = vrot.slane %v33, 4
    %v35 = vadd.f32 %v33, %v34
    %v36 = vrot.slane %v35, 2
    %v37 = vadd.f32 %v35, %v36
    %v38 = vrot.slane %v37, 1
    %v39 = vadd.f32 %v37, %v38
    %v40 = vadd.f32 %v39, 1e-10
    %v41 = vrcp.pop %v40
    %v42 = vmul.f32 1.0, %v41
    %v43 = vmul.f32 %v30, %v33
    %v44 = vrot.slane %v43, 4
    %v45 = vadd.f32 %v43, %v44
    %v46 = vrot.slane %v45, 2
    %v47 = vadd.f32 %v45, %v46
    %v48 = vrot.slane %v47, 1
    %v49 = vadd.f32 %v47, %v48
    %v50 = vmul.f32 %v49, %v42
    %v51 = vsub.f32 %v30, %v50
    %v52 = vmul.f32 %v51, %v51
    %v53 = vmul.f32 %v52, %v33
    %v54 = vrot.slane %v53, 4
    %v55 = vadd.f32 %v53, %v54
    %v56 = vrot.slane %v55, 2
    %v57 = vadd.f32 %v55, %v56
    %v58 = vrot.slane %v57, 1
    %v59 = vadd.f32 %v57, %v58
    %v60 = vmul.f32 %v59, %v42
    %v61 = vld [vmem:[%s2] sm:$0x1]
    %v62 = vadd.f32 %v60, 1e-05
    %v63 = vrsqrt.pop %v62
    %v64 = vmul.f32 %v61, %v63
    %v66 = vlaneseq
    %v67 = vshrl.u32 %v66, 7
    %v68 = vsub.s32 0, %v67
    %v69 = vrot.slane %v64, %v68
    %v71 = vmul.f32 %v51, %v69
    %v72 = vld [vmem:[%s3] sm:$0x1]
    %v74 = vlaneseq
    %v75 = vshrl.u32 %v74, 7
    %v76 = vsub.s32 0, %v75
    %v77 = vrot.slane %v72, %v76
    %v79 = vadd.f32 %v71, %v77
    %v80 = vmul.f32 %v79, %v33
    %81 = vst [vmem:[#allocation5] sm:$0xff] %v80
    // Predicated region
    $region22: #{tpu_custom_call.1} parent=1 // pred_check
      _
    $region23: #{tpu_custom_call.1} parent=1 // pred_check_branch
      %83 = sbr.rel (0) target = $region25
    $region24: #{tpu_custom_call.1} parent=1 // pred_region
      %s85 = ssub.s32 128, 128
      %86 = vsyncadd [#allocation4], %s85
      %s88 = sshll.u32 [#allocation5], 4
      %s89 = int_to_ptr.vmem [resolvable:$true] %s88
      %91 = dma.vmem_to_hbm [thread:$0]  %s89, 128, %s4, [#allocation4]
    $region25: #{tpu_custom_call.1} parent=1 // pred_fallthru
      _
    // Predicated region
    $region26: #{tpu_custom_call.1} parent=1 // pred_check
      _
    $region27: #{tpu_custom_call.1} parent=1 // pred_check_branch
      %93 = sbr.rel (0) target = $region29
    $region28: #{tpu_custom_call.1} parent=1 // pred_region
      %94 = dma.done [#allocation4], 128
    $region29: #{tpu_custom_call.1} parent=1 // pred_fallthru
      _
    %95 = vsyncpa [#allocation3], 1
    %96 = vsyncpa [#allocation4], 1

</llo_original>
